<compile_context>
chip_gen: v7x
topology: tpu7x:2x2x1
jax: 0.10.0
libtpu: 0.0.40
codegen_flags: <defaults>
</compile_context>

<pallas_src>
import functools
import math

import jax
import jax.numpy as jnp
from jax.experimental import pallas as pl
from jax.experimental.pallas import tpu as pltpu


def _round_up(x, m):
    return ((x + m - 1) // m) * m


def _vmem_capacity_bytes():
    """Per-core VMEM capacity; conservative 64 MiB fallback (v7x) if unknown."""
    try:
        info = pltpu.get_tpu_info()
        cap = getattr(info, "vmem_capacity_bytes", None)
        if cap:
            return int(cap)
    except Exception:
        pass
    return 64 * 1024 * 1024


def _vmem_need_bytes(tile_t, fea_p, mem_p, itemsize, return_att):
    """Rough per-step VMEM footprint for the chosen tiling."""
    # w_T + w, single-buffered, plus the tiny bias row.
    fixed = 2 * mem_p * fea_p * itemsize + 8 * mem_p * 4
    # x (double-buffered) + out (double-buffered) + att (double-buffered).
    per_row_io = itemsize * (2 * fea_p + 2 * fea_p + (2 * mem_p if return_att else 0))
    # Live f32 intermediates (logits / exp / att) estimated generously.
    per_row_f32 = 4 * (3 * mem_p + 2 * fea_p)
    return fixed + tile_t * (per_row_io + per_row_f32)


def _choose_tile_t(fea_p, mem_p, itemsize, vmem_cap, return_att):
    budget = int(vmem_cap * 0.7)
    for cand in (1024, 768, 512, 384, 256, 128, 64, 32, 16, 8):
        if _vmem_need_bytes(cand, fea_p, mem_p, itemsize, return_att) <= budget:
            return cand
    return 8


def memory_unit_kernel(*refs, shrink_thres, masked, matmul_dtype, return_att):
    if masked:
        x_ref, wt_ref, w_ref, bias_ref = refs[:4]
        out_refs = refs[4:]
    else:
        x_ref, wt_ref, w_ref = refs[:3]
        bias_ref = None
        out_refs = refs[3:]
    if return_att:
        out_ref, att_ref = out_refs
    else:
        (out_ref,) = out_refs
        att_ref = None

    x = x_ref[...]        # (tile_t, fea_p)
    w_t = wt_ref[...]     # (fea_p, mem_p)   resident, single-buffered
    w = w_ref[...]        # (mem_p, fea_p)   resident, single-buffered

    if matmul_dtype is not None:
        x_mm, wt_mm, w_mm = (a.astype(matmul_dtype) for a in (x, w_t, w))
    else:
        x_mm, wt_mm, w_mm = x, w_t, w

    # att_weight = F.linear(input, weight) = x @ w.T  (w pre-transposed in HBM).
    logits = jnp.dot(x_mm, wt_mm, preferred_element_type=jnp.float32)  # (tile_t, mem_p)

    if bias_ref is not None:
        # Additive mask for padded memory slots: 0 for real columns, -1e30 for pad.
        logits = logits + bias_ref[...]

    # softmax over the memory dimension
    m = jnp.max(logits, axis=-1, keepdims=True)
    e = jnp.exp(logits - m)
    denom = jnp.sum(e, axis=-1, keepdims=True)

    if shrink_thres > 0:
        # Approx reciprocal OK here: rows are exactly re-normalized below.
        att = e * pl.reciprocal(denom, approx=True)
        lambd = jnp.float32(shrink_thres)
        eps = jnp.float32(1e-12)
        shifted = att - lambd
        keep = att > lambd
        # Guard the denominator so the discarded lanes never produce inf/NaN.
        safe_den = jnp.where(keep, shifted, jnp.float32(1.0)) + eps
        shrunk = att * shifted * pl.reciprocal(safe_den, approx=True)
        att = jnp.where(keep, shrunk, jnp.float32(0.0))
        # F.normalize(p=1, dim=1); att >= 0 so L1 norm is a plain sum.
        l1 = jnp.sum(att, axis=-1, keepdims=True)
        att = att * pl.reciprocal(jnp.maximum(l1, eps), approx=False)  # exact final norm
    else:
        att = e * pl.reciprocal(denom, approx=False)  # exact: this IS the final norm

    # Single cast reused by the second matmul and (when dtypes match) the store.
    att_cast = att.astype(w_mm.dtype)

    # output = F.linear(att, weight.T) = att @ w
    out = jnp.dot(att_cast, w_mm, preferred_element_type=jnp.float32)
    out_ref[...] = out.astype(out_ref.dtype)

    if att_ref is not None:
        if att_ref.dtype == att_cast.dtype:
            att_ref[...] = att_cast
        else:
            att_ref[...] = att.astype(att_ref.dtype)


def _build_specs(tile_t, fea_p, mem_p, masked, return_att, single_buffer_weights):
    def resident(shape):
        if single_buffer_weights:
            # Constant index_map -> re-fetch skipped; Buffered(1) also halves
            # the resident footprint (matters most on v7x's 64 MiB VMEM).
            return pl.BlockSpec(shape, lambda i: (0, 0), pipeline_mode=pl.Buffered(1))
        return pl.BlockSpec(shape, lambda i: (0, 0))

    in_specs = [
        pl.BlockSpec((tile_t, fea_p), lambda i: (i, 0)),
        resident((fea_p, mem_p)),   # w_T
        resident((mem_p, fea_p)),   # w
    ]
    if masked:
        in_specs.append(resident((1, mem_p)))  # additive softmax mask row

    out_specs = [pl.BlockSpec((tile_t, fea_p), lambda i: (i, 0))]
    if return_att:
        out_specs.append(pl.BlockSpec((tile_t, mem_p), lambda i: (i, 0)))
    return in_specs, out_specs


def memory_unit_forward(x, weight, shrink_thres=0.0025, tile_t=None,
                        matmul_dtype=None, return_att=True):
    """x: (T, fea_dim); weight: (mem_dim, fea_dim). Returns dict(output[, att])."""
    T, fea_dim = x.shape
    mem_dim, fea_dim_w = weight.shape
    assert fea_dim == fea_dim_w

    # Lane-dense padding: last dims -> multiples of 128; T tile -> multiple of 8.
    fea_p = _round_up(fea_dim, 128)
    mem_p = _round_up(mem_dim, 128)
    itemsize = jnp.dtype(x.dtype).itemsize
    vmem_cap = _vmem_capacity_bytes()

    if tile_t is None:
        tile_t = _choose_tile_t(fea_p, mem_p, itemsize, vmem_cap, return_att)
    # Guarantee >= 2 grid steps when T allows (keeps both v7x TensorCores busy),
    # keep the tile sublane-aligned to 8.
    tile_t = max(8, min(_round_up(tile_t, 8), _round_up(max(8, (T + 1) // 2), 8)))
    t_p = _round_up(T, tile_t)

    masked = mem_p != mem_dim

    # TODO(synk): padding x is an extra HBM roundtrip; a full-extent fea block
    # would avoid it for the common "only fea needs padding" case — measure.
    if t_p != T or fea_p != fea_dim:
        x = jnp.pad(x, ((0, t_p - T), (0, fea_p - fea_dim)))
    if mem_p != mem_dim or fea_p != fea_dim:
        weight = jnp.pad(weight, ((0, mem_p - mem_dim), (0, fea_p - fea_dim)))
    w_t = weight.T  # one-time HBM-side transpose; no in-kernel vxpose

    inputs = [x, w_t, weight]
    if masked:
        bias = jnp.where(jnp.arange(mem_p)[None, :] < mem_dim,
                         jnp.float32(0.0), jnp.float32(-1e30))
        inputs.append(bias)

    if return_att:
        out_shape = (jax.ShapeDtypeStruct((t_p, fea_p), x.dtype),
                     jax.ShapeDtypeStruct((t_p, mem_p), x.dtype))
    else:
        out_shape = jax.ShapeDtypeStruct((t_p, fea_p), x.dtype)

    # Generation-aware VMEM limit: actual need + headroom, capped at ~85% of
    # physical VMEM (≈54 MiB on v7x, ≈108 MiB on v5e/v6e).
    need = _vmem_need_bytes(tile_t, fea_p, mem_p, itemsize, return_att)
    vmem_limit = int(min(max(need + 4 * 1024 * 1024, 32 * 1024 * 1024),
                         int(vmem_cap * 0.85)))

    kernel = functools.partial(
        memory_unit_kernel, shrink_thres=shrink_thres, masked=masked,
        matmul_dtype=matmul_dtype, return_att=return_att)

    def run(single_buffer_weights):
        in_specs, out_specs = _build_specs(
            tile_t, fea_p, mem_p, masked, return_att, single_buffer_weights)
        return pl.pallas_call(
            kernel,
            out_shape=out_shape,
            grid=(t_p // tile_t,),
            in_specs=in_specs,
            out_specs=tuple(out_specs) if return_att else out_specs[0],
            compiler_params=pltpu.CompilerParams(
                dimension_semantics=("parallel",),
                vmem_limit_bytes=vmem_limit,
            ),
        )(*inputs)

    try:
        outs = run(True)           # single-buffered resident weights
    except Exception:
        outs = run(False)          # fallback: default pipelining

    if return_att:
        out, att = outs
        return {"output": out[:T, :fea_dim], "att": att[:T, :mem_dim]}
    return {"output": outs[:T, :fea_dim]}


def memory_unit_reference(x, weight, shrink_thres=0.0025):
    """Pure-JAX reference mirroring the PyTorch module."""
    x = x.astype(jnp.float32)
    w = weight.astype(jnp.float32)
    att = jax.nn.softmax(x @ w.T, axis=1)
    if shrink_thres > 0:
        shifted = att - shrink_thres
        att = jnp.maximum(shifted, 0.0) * att / (jnp.abs(shifted) + 1e-12)
        att = att / jnp.maximum(jnp.sum(jnp.abs(att), axis=1, keepdims=True), 1e-12)
    return {"output": att @ w, "att": att}


def init_weight(key, mem_dim, fea_dim):
    # reset_parameters(): uniform(-stdv, stdv), stdv = 1/sqrt(fea_dim)
    stdv = 1.0 / math.sqrt(fea_dim)
    return jax.random.uniform(
        key, (mem_dim, fea_dim), dtype=jnp.float32, minval=-stdv, maxval=stdv
    )


if __name__ == "__main__":
    T, fea_dim, mem_dim = 16, 32, 24   # exercises fea/mem padding and a 2-step grid
    key = jax.random.PRNGKey(0)
    kx, kw = jax.random.split(key)

    x = jax.random.normal(kx, (T, fea_dim), dtype=jnp.float32)
    weight = init_weight(kw, mem_dim, fea_dim)

    res = memory_unit_forward(x, weight, shrink_thres=0.0025)
    jax.block_until_ready(res["output"])
    jax.block_until_ready(res["att"])

    assert res["output"].shape == (T, fea_dim)
    assert res["att"].shape == (T, mem_dim)

    ref = memory_unit_reference(x, weight, shrink_thres=0.0025)
    assert jnp.allclose(res["att"], ref["att"], rtol=1e-2, atol=2e-4)
    assert jnp.allclose(res["output"], ref["output"], rtol=1e-2, atol=2e-4)

    # Also exercise the bf16-MXU fast path (f32 accumulation, f32 softmax math).
    res_bf16 = memory_unit_forward(x, weight, shrink_thres=0.0025,
                                   matmul_dtype=jnp.bfloat16)
    jax.block_until_ready(res_bf16["output"])
    assert jnp.allclose(res_bf16["output"], ref["output"], rtol=1e-1, atol=1e-2)

    print("KERNEL_OK")
</pallas_src>

<mosaic_0001>
module attributes {stable_mosaic.version = 11 : i64} {
  func.func @memory_unit_kernel(%arg0: i32, %arg1: memref<8x128xf32, #tpu.memory_space<vmem>>, %arg2: memref<128x128xf32, #tpu.memory_space<vmem>>, %arg3: memref<128x128xf32, #tpu.memory_space<vmem>>, %arg4: memref<1x128xf32, #tpu.memory_space<vmem>>, %arg5: memref<8x128xf32, #tpu.memory_space<vmem>>, %arg6: memref<8x128xf32, #tpu.memory_space<vmem>>) attributes {dimension_semantics = [#tpu.dimension_semantics<parallel>], iteration_bounds = array<i64: 2>, scalar_prefetch = 0 : i64, scratch_operands = 0 : i64, tpu.core_type = #tpu.core_type<tc>, window_params = [{transform_indices = @transform_0, window_bounds = array<i64: 8, 128>}, {pipeline_mode = #tpu.pipeline_mode<synchronous>, transform_indices = @transform_1, window_bounds = array<i64: 128, 128>}, {pipeline_mode = #tpu.pipeline_mode<synchronous>, transform_indices = @transform_2, window_bounds = array<i64: 128, 128>}, {pipeline_mode = #tpu.pipeline_mode<synchronous>, transform_indices = @transform_3, window_bounds = array<i64: 1, 128>}, {transform_indices = @transform_4, window_bounds = array<i64: 8, 128>}, {transform_indices = @transform_5, window_bounds = array<i64: 8, 128>}]} {
    %c0 = arith.constant 0 : index
    %c0_0 = arith.constant 0 : index
    %0 = vector.load %arg1[%c0, %c0_0] : memref<8x128xf32, #tpu.memory_space<vmem>>, vector<8x128xf32>
    %c0_1 = arith.constant 0 : index
    %c0_2 = arith.constant 0 : index
    %1 = vector.load %arg2[%c0_1, %c0_2] : memref<128x128xf32, #tpu.memory_space<vmem>>, vector<128x128xf32>
    %c0_3 = arith.constant 0 : index
    %c0_4 = arith.constant 0 : index
    %2 = vector.load %arg3[%c0_3, %c0_4] : memref<128x128xf32, #tpu.memory_space<vmem>>, vector<128x128xf32>
    %cst = arith.constant dense<0.000000e+00> : vector<8x128xf32>
    %3 = tpu.matmul %0, %1, %cst {dimension_numbers = #tpu.dot_dimension_numbers<[1], [0], [0], [1], [0, 0, 1, 1], [], []>} : vector<8x128xf32>, vector<128x128xf32>, vector<8x128xf32> -> vector<8x128xf32>
    %c0_5 = arith.constant 0 : index
    %c0_6 = arith.constant 0 : index
    %4 = vector.load %arg4[%c0_5, %c0_6] : memref<1x128xf32, #tpu.memory_space<vmem>>, vector<1x128xf32>
    %5 = vector.broadcast %4 : vector<1x128xf32> to vector<8x128xf32>
    %6 = arith.addf %3, %5 : vector<8x128xf32>
    %cst_7 = arith.constant dense<0xFF800000> : vector<8xf32>
    %7 = vector.multi_reduction <maximumf>, %6, %cst_7 [1] : vector<8x128xf32> to vector<8xf32>
    %8 = vector.shape_cast %7 : vector<8xf32> to vector<8x1xf32>
    %9 = vector.broadcast %8 : vector<8x1xf32> to vector<8x128xf32>
    %10 = arith.subf %6, %9 : vector<8x128xf32>
    %11 = math.exp %10 : vector<8x128xf32>
    %cst_8 = arith.constant dense<0.000000e+00> : vector<8xf32>
    %12 = vector.multi_reduction <add>, %11, %cst_8 [1] : vector<8x128xf32> to vector<8xf32>
    %13 = vector.shape_cast %12 : vector<8xf32> to vector<8x1xf32>
    %14 = tpu.reciprocal %13 {approx = true} : vector<8x1xf32> -> vector<8x1xf32>
    %15 = vector.broadcast %14 : vector<8x1xf32> to vector<8x128xf32>
    %16 = arith.mulf %11, %15 : vector<8x128xf32>
    %cst_9 = arith.constant 2.500000e-03 : f32
    %17 = vector.broadcast %cst_9 : f32 to vector<8x128xf32>
    %18 = arith.subf %16, %17 : vector<8x128xf32>
    %cst_10 = arith.constant 2.500000e-03 : f32
    %19 = vector.broadcast %cst_10 : f32 to vector<8x128xf32>
    %20 = arith.cmpf ogt, %16, %19 : vector<8x128xf32>
    %cst_11 = arith.constant 1.000000e+00 : f32
    %21 = vector.broadcast %cst_11 : f32 to vector<8x128xf32>
    %22 = arith.select %20, %18, %21 : vector<8x128xi1>, vector<8x128xf32>
    %cst_12 = arith.constant 9.99999996E-13 : f32
    %23 = vector.broadcast %cst_12 : f32 to vector<8x128xf32>
    %24 = arith.addf %22, %23 : vector<8x128xf32>
    %25 = arith.mulf %16, %18 : vector<8x128xf32>
    %26 = tpu.reciprocal %24 {approx = true} : vector<8x128xf32> -> vector<8x128xf32>
    %27 = arith.mulf %25, %26 : vector<8x128xf32>
    %cst_13 = arith.constant 0.000000e+00 : f32
    %28 = vector.broadcast %cst_13 : f32 to vector<8x128xf32>
    %29 = arith.select %20, %27, %28 : vector<8x128xi1>, vector<8x128xf32>
    %cst_14 = arith.constant dense<0.000000e+00> : vector<8xf32>
    %30 = vector.multi_reduction <add>, %29, %cst_14 [1] : vector<8x128xf32> to vector<8xf32>
    %31 = vector.shape_cast %30 : vector<8xf32> to vector<8x1xf32>
    %cst_15 = arith.constant 9.99999996E-13 : f32
    %32 = vector.broadcast %cst_15 : f32 to vector<8x1xf32>
    %33 = arith.maximumf %31, %32 : vector<8x1xf32>
    %34 = tpu.reciprocal %33 : vector<8x1xf32> -> vector<8x1xf32>
    %35 = vector.broadcast %34 : vector<8x1xf32> to vector<8x128xf32>
    %36 = arith.mulf %29, %35 : vector<8x128xf32>
    %cst_16 = arith.constant dense<0.000000e+00> : vector<8x128xf32>
    %37 = tpu.matmul %36, %2, %cst_16 {dimension_numbers = #tpu.dot_dimension_numbers<[1], [0], [0], [1], [0, 0, 1, 1], [], []>} : vector<8x128xf32>, vector<128x128xf32>, vector<8x128xf32> -> vector<8x128xf32>
    %c0_17 = arith.constant 0 : index
    %c0_18 = arith.constant 0 : index
    %38 = vector.load %arg5[%c0_17, %c0_18] : memref<8x128xf32, #tpu.memory_space<vmem>>, vector<8x128xf32>
    tpu.vector_store %arg5[%c0_17, %c0_18], %37 {strides = array<i32>} : memref<8x128xf32, #tpu.memory_space<vmem>>, vector<8x128xf32>,
    %c0_19 = arith.constant 0 : index
    %c0_20 = arith.constant 0 : index
    %39 = vector.load %arg6[%c0_19, %c0_20] : memref<8x128xf32, #tpu.memory_space<vmem>>, vector<8x128xf32>
    tpu.vector_store %arg6[%c0_19, %c0_20], %36 {strides = array<i32>} : memref<8x128xf32, #tpu.memory_space<vmem>>, vector<8x128xf32>,
    return
  }
  func.func @transform_0(%arg0: i32) -> (i32, i32) {
    %c0_i32 = arith.constant 0 : i32
    %c0_i32_0 = arith.constant 0 : i32
    return %arg0, %c0_i32 : i32, i32
  }
  func.func @transform_1(%arg0: i32) -> (i32, i32) {
    %c0_i32 = arith.constant 0 : i32
    %c0_i32_0 = arith.constant 0 : i32
    %c0_i32_1 = arith.constant 0 : i32
    return %c0_i32, %c0_i32_0 : i32, i32
  }
  func.func @transform_2(%arg0: i32) -> (i32, i32) {
    %c0_i32 = arith.constant 0 : i32
    %c0_i32_0 = arith.constant 0 : i32
    %c0_i32_1 = arith.constant 0 : i32
    return %c0_i32, %c0_i32_0 : i32, i32
  }
  func.func @transform_3(%arg0: i32) -> (i32, i32) {
    %c0_i32 = arith.constant 0 : i32
    %c0_i32_0 = arith.constant 0 : i32
    %c0_i32_1 = arith.constant 0 : i32
    return %c0_i32, %c0_i32_0 : i32, i32
  }
  func.func @transform_4(%arg0: i32) -> (i32, i32) {
    %c0_i32 = arith.constant 0 : i32
    %c0_i32_0 = arith.constant 0 : i32
    return %arg0, %c0_i32 : i32, i32
  }
  func.func @transform_5(%arg0: i32) -> (i32, i32) {
    %c0_i32 = arith.constant 0 : i32
    %c0_i32_0 = arith.constant 0 : i32
    return %arg0, %c0_i32 : i32, i32
  }
}

module attributes {stable_mosaic.version = 11 : i64} {
  func.func @memory_unit_kernel(%arg0: i32, %arg1: memref<8x128xf32, #tpu.memory_space<vmem>>, %arg2: memref<128x128xf32, #tpu.memory_space<vmem>>, %arg3: memref<128x128xf32, #tpu.memory_space<vmem>>, %arg4: memref<1x128xf32, #tpu.memory_space<vmem>>, %arg5: memref<8x128xf32, #tpu.memory_space<vmem>>, %arg6: memref<8x128xf32, #tpu.memory_space<vmem>>) attributes {dimension_semantics = [#tpu.dimension_semantics<parallel>], iteration_bounds = array<i64: 2>, scalar_prefetch = 0 : i64, scratch_operands = 0 : i64, tpu.core_type = #tpu.core_type<tc>, window_params = [{transform_indices = @transform_0, window_bounds = array<i64: 8, 128>}, {pipeline_mode = #tpu.pipeline_mode<synchronous>, transform_indices = @transform_1, window_bounds = array<i64: 128, 128>}, {pipeline_mode = #tpu.pipeline_mode<synchronous>, transform_indices = @transform_2, window_bounds = array<i64: 128, 128>}, {pipeline_mode = #tpu.pipeline_mode<synchronous>, transform_indices = @transform_3, window_bounds = array<i64: 1, 128>}, {transform_indices = @transform_4, window_bounds = array<i64: 8, 128>}, {transform_indices = @transform_5, window_bounds = array<i64: 8, 128>}]} {
    %c0 = arith.constant 0 : index
    %c0_0 = arith.constant 0 : index
    %0 = vector.load %arg1[%c0, %c0_0] : memref<8x128xf32, #tpu.memory_space<vmem>>, vector<8x128xf32>
    %c0_1 = arith.constant 0 : index
    %c0_2 = arith.constant 0 : index
    %1 = vector.load %arg2[%c0_1, %c0_2] : memref<128x128xf32, #tpu.memory_space<vmem>>, vector<128x128xf32>
    %c0_3 = arith.constant 0 : index
    %c0_4 = arith.constant 0 : index
    %2 = vector.load %arg3[%c0_3, %c0_4] : memref<128x128xf32, #tpu.memory_space<vmem>>, vector<128x128xf32>
    %cst = arith.constant dense<0.000000e+00> : vector<8x128xf32>
    %3 = tpu.matmul %0, %1, %cst {dimension_numbers = #tpu.dot_dimension_numbers<[1], [0], [0], [1], [0, 0, 1, 1], [], []>} : vector<8x128xf32>, vector<128x128xf32>, vector<8x128xf32> -> vector<8x128xf32>
    %c0_5 = arith.constant 0 : index
    %c0_6 = arith.constant 0 : index
    %4 = vector.load %arg4[%c0_5, %c0_6] : memref<1x128xf32, #tpu.memory_space<vmem>>, vector<1x128xf32>
    %5 = vector.broadcast %4 : vector<1x128xf32> to vector<8x128xf32>
    %6 = arith.addf %3, %5 : vector<8x128xf32>
    %cst_7 = arith.constant dense<0xFF800000> : vector<8xf32>
    %7 = vector.multi_reduction <maximumf>, %6, %cst_7 [1] : vector<8x128xf32> to vector<8xf32>
    %8 = vector.shape_cast %7 : vector<8xf32> to vector<8x1xf32>
    %9 = vector.broadcast %8 : vector<8x1xf32> to vector<8x128xf32>
    %10 = arith.subf %6, %9 : vector<8x128xf32>
    %11 = math.exp %10 : vector<8x128xf32>
    %cst_8 = arith.constant dense<0.000000e+00> : vector<8xf32>
    %12 = vector.multi_reduction <add>, %11, %cst_8 [1] : vector<8x128xf32> to vector<8xf32>
    %13 = vector.shape_cast %12 : vector<8xf32> to vector<8x1xf32>
    %14 = tpu.reciprocal %13 {approx = true} : vector<8x1xf32> -> vector<8x1xf32>
    %15 = vector.broadcast %14 : vector<8x1xf32> to vector<8x128xf32>
    %16 = arith.mulf %11, %15 : vector<8x128xf32>
    %cst_9 = arith.constant 2.500000e-03 : f32
    %17 = vector.broadcast %cst_9 : f32 to vector<8x128xf32>
    %18 = arith.subf %16, %17 : vector<8x128xf32>
    %cst_10 = arith.constant 2.500000e-03 : f32
    %19 = vector.broadcast %cst_10 : f32 to vector<8x128xf32>
    %20 = arith.cmpf ogt, %16, %19 : vector<8x128xf32>
    %cst_11 = arith.constant 1.000000e+00 : f32
    %21 = vector.broadcast %cst_11 : f32 to vector<8x128xf32>
    %22 = arith.select %20, %18, %21 : vector<8x128xi1>, vector<8x128xf32>
    %cst_12 = arith.constant 9.99999996E-13 : f32
    %23 = vector.broadcast %cst_12 : f32 to vector<8x128xf32>
    %24 = arith.addf %22, %23 : vector<8x128xf32>
    %25 = arith.mulf %16, %18 : vector<8x128xf32>
    %26 = tpu.reciprocal %24 {approx = true} : vector<8x128xf32> -> vector<8x128xf32>
    %27 = arith.mulf %25, %26 : vector<8x128xf32>
    %cst_13 = arith.constant 0.000000e+00 : f32
    %28 = vector.broadcast %cst_13 : f32 to vector<8x128xf32>
    %29 = arith.select %20, %27, %28 : vector<8x128xi1>, vector<8x128xf32>
    %cst_14 = arith.constant dense<0.000000e+00> : vector<8xf32>
    %30 = vector.multi_reduction <add>, %29, %cst_14 [1] : vector<8x128xf32> to vector<8xf32>
    %31 = vector.shape_cast %30 : vector<8xf32> to vector<8x1xf32>
    %cst_15 = arith.constant 9.99999996E-13 : f32
    %32 = vector.broadcast %cst_15 : f32 to vector<8x1xf32>
    %33 = arith.maximumf %31, %32 : vector<8x1xf32>
    %34 = tpu.reciprocal %33 : vector<8x1xf32> -> vector<8x1xf32>
    %35 = vector.broadcast %34 : vector<8x1xf32> to vector<8x128xf32>
    %36 = arith.mulf %29, %35 : vector<8x128xf32>
    %cst_16 = arith.constant dense<0.000000e+00> : vector<8x128xf32>
    %37 = tpu.matmul %36, %2, %cst_16 {dimension_numbers = #tpu.dot_dimension_numbers<[1], [0], [0], [1], [0, 0, 1, 1], [], []>} : vector<8x128xf32>, vector<128x128xf32>, vector<8x128xf32> -> vector<8x128xf32>
    %c0_17 = arith.constant 0 : index
    %c0_18 = arith.constant 0 : index
    %38 = vector.load %arg5[%c0_17, %c0_18] : memref<8x128xf32, #tpu.memory_space<vmem>>, vector<8x128xf32>
    tpu.vector_store %arg5[%c0_17, %c0_18], %37 {strides = array<i32>} : memref<8x128xf32, #tpu.memory_space<vmem>>, vector<8x128xf32>,
    %c0_19 = arith.constant 0 : index
    %c0_20 = arith.constant 0 : index
    %39 = vector.load %arg6[%c0_19, %c0_20] : memref<8x128xf32, #tpu.memory_space<vmem>>, vector<8x128xf32>
    tpu.vector_store %arg6[%c0_19, %c0_20], %36 {strides = array<i32>} : memref<8x128xf32, #tpu.memory_space<vmem>>, vector<8x128xf32>,
    return
  }
  func.func @transform_0(%arg0: i32) -> (i32, i32) {
    %c0_i32 = arith.constant 0 : i32
    %c0_i32_0 = arith.constant 0 : i32
    return %arg0, %c0_i32 : i32, i32
  }
  func.func @transform_1(%arg0: i32) -> (i32, i32) {
    %c0_i32 = arith.constant 0 : i32
    %c0_i32_0 = arith.constant 0 : i32
    %c0_i32_1 = arith.constant 0 : i32
    return %c0_i32, %c0_i32_0 : i32, i32
  }
  func.func @transform_2(%arg0: i32) -> (i32, i32) {
    %c0_i32 = arith.constant 0 : i32
    %c0_i32_0 = arith.constant 0 : i32
    %c0_i32_1 = arith.constant 0 : i32
    return %c0_i32, %c0_i32_0 : i32, i32
  }
  func.func @transform_3(%arg0: i32) -> (i32, i32) {
    %c0_i32 = arith.constant 0 : i32
    %c0_i32_0 = arith.constant 0 : i32
    %c0_i32_1 = arith.constant 0 : i32
    return %c0_i32, %c0_i32_0 : i32, i32
  }
  func.func @transform_4(%arg0: i32) -> (i32, i32) {
    %c0_i32 = arith.constant 0 : i32
    %c0_i32_0 = arith.constant 0 : i32
    return %arg0, %c0_i32 : i32, i32
  }
  func.func @transform_5(%arg0: i32) -> (i32, i32) {
    %c0_i32 = arith.constant 0 : i32
    %c0_i32_0 = arith.constant 0 : i32
    return %arg0, %c0_i32 : i32, i32
  }
}

</mosaic_0001>

<llo_original>
// kernel: tpu_custom_call.1
$region0: #{tpu_custom_call.1}
  #allocation0 [shape = 'u32[]', space=smem, size = 0x4, offset = 0x4, fixed_abs, tag = 'smem constant byte address 0x4 - core index']
  #allocation1 [shape = 'u32[144,128]{1,0:T(1,128)}', space=vmem, size = 0x12000, scoped, tag = 'internal scratch']
  %s0 = inlined_call_operand.hbm [shape: f32[16,128], index: 0, kind: input, shape index: {}]
  %s1 = inlined_call_operand.hbm [shape: f32[128,128], index: 1, kind: input, shape index: {}]
  %s2 = inlined_call_operand.hbm [shape: f32[128,128], index: 2, kind: input, shape index: {}]
  %s3 = inlined_call_operand.vmem [shape: f32[1,128], index: 3, kind: input, shape index: {}]
  %s4 = inlined_call_operand.hbm [shape: f32[16,128], index: 4, kind: output, shape index: {0}]
  %s5 = inlined_call_operand.hbm [shape: f32[16,128], index: 5, kind: output, shape index: {1}]
  %6 = xla_tuple %s4, %s5
  %s7 = sld [smem:[#allocation0]]
  $region69: #{tpu_custom_call.1} parent=0
    _
  %s9 = ssub.s32 1, %s7
  %s10 = scalar_select 0, %s9, %s7
  $region1: #{tpu_custom_call.1} parent=0
    #allocation2 [shape = 'u8[8192]{0}', space=vmem, size = 0x2000, scoped, tag = 'input window, operand 0']
    #allocation3 [shape = 's32[2]{0}', space=sflag, size = 0x8, scoped, tag = 'scoped memory for tpu_custom_call.1']
    #allocation4 [shape = 's32[2]{0}', space=sflag, size = 0x8, scoped, tag = 'scoped memory for tpu_custom_call.1']
    #allocation5 [shape = 'u8[65536]{0}', space=vmem, size = 0x10000, scoped, tag = 'input window, operand 1, single buffered']
    #allocation6 [shape = 's32[1]{0}', space=sflag, size = 0x4, scoped, tag = 'scoped memory for tpu_custom_call.1']
    #allocation7 [shape = 'u8[65536]{0}', space=vmem, size = 0x10000, scoped, tag = 'input window, operand 2, single buffered']
    #allocation8 [shape = 'u8[8192]{0}', space=vmem, size = 0x2000, scoped, tag = 'output window, operand 0']
    #allocation9 [shape = 'u8[8192]{0}', space=vmem, size = 0x2000, scoped, tag = 'output window, operand 1']
    #allocation10 [shape = 's32[2]{0}', space=sflag, size = 0x8, scoped, tag = 'scoped memory for tpu_custom_call.1']
    %11 = vsyncpa [#allocation3], 0
    %s12 = scalar_lea.sflag [#allocation3], 1
    %13 = vsyncpa %s12, 0
    %14 = vsyncpa [#allocation6], 0
    %15 = vsyncpa [#allocation4], 0
    %s16 = scalar_lea.sflag [#allocation4], 1
    %17 = vsyncpa %s16, 0
    %18 = vsyncpa [#allocation10], 0
    %s19 = scalar_lea.sflag [#allocation10], 1
    %20 = vsyncpa %s19, 0
    loop: start=0, step=1, limit=4
    $region2: #{tpu_custom_call.1} parent=1 // loop_pre_header
      _
    $region3: #{tpu_custom_call.1} parent=1 // loop_header
      %s22 = sphi 0, %s26
      %p23 = scmp.ge.s32.totalorder %s22, 4
      %s32 = sphi 0, %s34
      %s35 = sphi 0, %s32
      %s36 = sphi 0, %s35
      %s52 = sphi 0, %s36
      %s56 = sphi 0, %s56
      %s58 = sphi 0, %s56
      %s59 = sphi 0, %s58
      %s73 = sphi 0, %s59
      %s77 = sphi 0, %s77
      %s79 = sphi 0, %s77
      %s80 = sphi 0, %s79
      %s94 = sphi 0, %s80
      %s98 = sphi 0, %s98
      %s100 = sphi 0, %s98
      %s101 = sphi 0, %s100
      %s115 = sphi 0, %s101
      %s121 = sphi 0, %s123
      %s124 = sphi 0, %s121
      %s125 = sphi 0, %s124
      %s141 = sphi 0, %s125
      %s147 = sphi 0, %s149
      %s150 = sphi 0, %s147
      %s151 = sphi 0, %s150
      %s167 = sphi 0, %s151
    $region4: #{tpu_custom_call.1} parent=1 // loop_header_branch
      %25 = sbr.rel (%p23) target = $region8
    $region5: #{tpu_custom_call.1} parent=1 // loop_body
      %s27 = ssub.s32 %s22, 1
      %s28 = ssub.s32 %s22, 2
      %s29 = sadd.s32 %s22, 1
      %s30 = ssub.s32 %s22, %s29
      %p31 = scmp.eq.s32.totalorder %s30, 0
      %s33 = sadd.s32 %s32, 1
      %s34 = scalar_select %p31, %s32, %s33
      %p37 = pneg %p31
      %p38 = scmp.eq.s32.totalorder %s22, 1
      %p39 = por %p37, %p38
      %p40 = scmp.ne.s32.totalorder %s32, %s35
      %p41 = scmp.eq.s32.totalorder %s22, 0
      %p42 = por %p40, %p41
      %p43 = scmp.ne.s32.totalorder %s32, %s35
      %p44 = scmp.eq.s32.totalorder %s27, 1
      %p45 = por %p43, %p44
      %p46 = scmp.ne.s32.totalorder %s35, %s36
      %p47 = scmp.eq.s32.totalorder %s27, 0
      %p48 = por %p46, %p47
      %p49 = scmp.ne.s32.totalorder %s35, %s36
      %p50 = scmp.eq.s32.totalorder %s28, 1
      %p51 = por %p49, %p50
      %p53 = scmp.ne.s32.totalorder %s36, %s52
      %p54 = scmp.eq.s32.totalorder %s28, 0
      %p55 = por %p53, %p54
      %s57 = sadd.s32 %s56, 1
      %p60 = scmp.eq.s32.totalorder %s22, 1
      %p61 = scmp.ne.s32.totalorder %s56, %s58
      %p62 = scmp.eq.s32.totalorder %s22, 0
      %p63 = por %p61, %p62
      %p64 = scmp.ne.s32.totalorder %s56, %s58
      %p65 = scmp.eq.s32.totalorder %s27, 1
      %p66 = por %p64, %p65
      %p67 = scmp.ne.s32.totalorder %s58, %s59
      %p68 = scmp.eq.s32.totalorder %s27, 0
      %p69 = por %p67, %p68
      %p70 = scmp.ne.s32.totalorder %s58, %s59
      %p71 = scmp.eq.s32.totalorder %s28, 1
      %p72 = por %p70, %p71
      %p74 = scmp.ne.s32.totalorder %s59, %s73
      %p75 = scmp.eq.s32.totalorder %s28, 0
      %p76 = por %p74, %p75
      %s78 = sadd.s32 %s77, 1
      %p81 = scmp.eq.s32.totalorder %s22, 1
      %p82 = scmp.ne.s32.totalorder %s77, %s79
      %p83 = scmp.eq.s32.totalorder %s22, 0
      %p84 = por %p82, %p83
      %p85 = scmp.ne.s32.totalorder %s77, %s79
      %p86 = scmp.eq.s32.totalorder %s27, 1
      %p87 = por %p85, %p86
      %p88 = scmp.ne.s32.totalorder %s79, %s80
      %p89 = scmp.eq.s32.totalorder %s27, 0
      %p90 = por %p88, %p89
      %p91 = scmp.ne.s32.totalorder %s79, %s80
      %p92 = scmp.eq.s32.totalorder %s28, 1
      %p93 = por %p91, %p92
      %p95 = scmp.ne.s32.totalorder %s80, %s94
      %p96 = scmp.eq.s32.totalorder %s28, 0
      %p97 = por %p95, %p96
      %s99 = sadd.s32 %s98, 1
      %p102 = scmp.eq.s32.totalorder %s22, 1
      %p103 = scmp.ne.s32.totalorder %s98, %s100
      %p104 = scmp.eq.s32.totalorder %s22, 0
      %p105 = por %p103, %p104
      %p106 = scmp.ne.s32.totalorder %s98, %s100
      %p107 = scmp.eq.s32.totalorder %s27, 1
      %p108 = por %p106, %p107
      %p109 = scmp.ne.s32.totalorder %s100, %s101
      %p110 = scmp.eq.s32.totalorder %s27, 0
      %p111 = por %p109, %p110
      %p112 = scmp.ne.s32.totalorder %s100, %s101
      %p113 = scmp.eq.s32.totalorder %s28, 1
      %p114 = por %p112, %p113
      %p116 = scmp.ne.s32.totalorder %s101, %s115
      %p117 = scmp.eq.s32.totalorder %s28, 0
      %p118 = por %p116, %p117
      %s119 = ssub.s32 %s22, %s29
      %p120 = scmp.eq.s32.totalorder %s119, 0
      %s122 = sadd.s32 %s121, 1
      %s123 = scalar_select %p120, %s121, %s122
      %p126 = pneg %p120
      %p127 = scmp.eq.s32.totalorder %s22, 1
      %p128 = por %p126, %p127
      %p129 = scmp.ne.s32.totalorder %s121, %s124
      %p130 = scmp.eq.s32.totalorder %s22, 0
      %p131 = por %p129, %p130
      %p132 = scmp.ne.s32.totalorder %s121, %s124
      %p133 = scmp.eq.s32.totalorder %s27, 1
      %p134 = por %p132, %p133
      %p135 = scmp.ne.s32.totalorder %s124, %s125
      %p136 = scmp.eq.s32.totalorder %s27, 0
      %p137 = por %p135, %p136
      %p138 = scmp.ne.s32.totalorder %s124, %s125
      %p139 = scmp.eq.s32.totalorder %s28, 1
      %p140 = por %p138, %p139
      %p142 = scmp.ne.s32.totalorder %s125, %s141
      %p143 = scmp.eq.s32.totalorder %s28, 0
      %p144 = por %p142, %p143
      %s145 = ssub.s32 %s22, %s29
      %p146 = scmp.eq.s32.totalorder %s145, 0
      %s148 = sadd.s32 %s147, 1
      %s149 = scalar_select %p146, %s147, %s148
      %p152 = pneg %p146
      %p153 = scmp.eq.s32.totalorder %s22, 1
      %p154 = por %p152, %p153
      %p155 = scmp.ne.s32.totalorder %s147, %s150
      %p156 = scmp.eq.s32.totalorder %s22, 0
      %p157 = por %p155, %p156
      %p158 = scmp.ne.s32.totalorder %s147, %s150
      %p159 = scmp.eq.s32.totalorder %s27, 1
      %p160 = por %p158, %p159
      %p161 = scmp.ne.s32.totalorder %s150, %s151
      %p162 = scmp.eq.s32.totalorder %s27, 0
      %p163 = por %p161, %p162
      %p164 = scmp.ne.s32.totalorder %s150, %s151
      %p165 = scmp.eq.s32.totalorder %s28, 1
      %p166 = por %p164, %p165
      %p168 = scmp.ne.s32.totalorder %s151, %s167
      %p169 = scmp.eq.s32.totalorder %s28, 0
      %p170 = por %p168, %p169
      %p171 = scmp.le.s32.totalorder 1, %s22
      %p172 = scmp.lt.s32.totalorder %s22, 3
      %p173 = pnand %p171, %p172
      %p174 = pneg %p173
      // Predicated region
      $region9: #{tpu_custom_call.1} parent=5 // pred_check
        _
      $region10: #{tpu_custom_call.1} parent=5 // pred_check_branch
        %176 = sbr.rel (%p173) target = $region12
      $region11: #{tpu_custom_call.1} parent=5 // pred_region
        %s177 = ssub.s32 %s22, 1
        // Predicated region
        $region13: #{tpu_custom_call.1} parent=11 // pred_check
          %p178 = pneg %p69
        $region14: #{tpu_custom_call.1} parent=11 // pred_check_branch
          %180 = sbr.rel (%p178) target = $region16
        $region15: #{tpu_custom_call.1} parent=11 // pred_region
          %s182 = ssub.s32 2048, 2048
          %183 = vsyncadd [#allocation6], %s182
          %s184 = sshll.u32 [#allocation5], 4
          %s185 = int_to_ptr.vmem [resolvable:$true] %s184
          %190 = dma.hbm_to_vmem [thread:$0]  %s1, 2048, %s185, [#allocation6], 128, 128, 8
        $region16: #{tpu_custom_call.1} parent=11 // pred_fallthru
          _
        // Predicated region
        $region17: #{tpu_custom_call.1} parent=11 // pred_check
          %p191 = pneg %p90
        $region18: #{tpu_custom_call.1} parent=11 // pred_check_branch
          %193 = sbr.rel (%p191) target = $region20
        $region19: #{tpu_custom_call.1} parent=11 // pred_region
          %s195 = ssub.s32 2048, 2048
          %196 = vsyncadd [#allocation6], %s195
          %s197 = sshll.u32 [#allocation7], 4
          %s198 = int_to_ptr.vmem [resolvable:$true] %s197
          %203 = dma.hbm_to_vmem [thread:$0]  %s2, 2048, %s198, [#allocation6], 128, 128, 8
        $region20: #{tpu_custom_call.1} parent=11 // pred_fallthru
          _
        // Predicated region
        $region21: #{tpu_custom_call.1} parent=11 // pred_check
          %p204 = pneg %p111
        $region22: #{tpu_custom_call.1} parent=11 // pred_check_branch
          %206 = sbr.rel (%p204) target = $region24
        $region23: #{tpu_custom_call.1} parent=11 // pred_region
          _
        $region24: #{tpu_custom_call.1} parent=11 // pred_fallthru
          _
      $region12: #{tpu_custom_call.1} parent=5 // pred_fallthru
        _
      %p207 = scmp.lt.s32.totalorder %s22, 2
      // Predicated region
      $region25: #{tpu_custom_call.1} parent=5 // pred_check
        %p208 = pneg %p207
      $region26: #{tpu_custom_call.1} parent=5 // pred_check_branch
        %210 = sbr.rel (%p208) target = $region28
      $region27: #{tpu_custom_call.1} parent=5 // pred_region
        // Predicated region
        $region29: #{tpu_custom_call.1} parent=27 // pred_check
          %p211 = pneg %p42
        $region30: #{tpu_custom_call.1} parent=27 // pred_check_branch
          %213 = sbr.rel (%p211) target = $region32
        $region31: #{tpu_custom_call.1} parent=27 // pred_region
          %s214 = sand.u32 %s32, 1
          %s215 = scalar_lea.sflag [#allocation3], %s214
          %s216 = sand.u32 %s32, 1
          %s217 = smul.addr %s216, 8
          %s218 = scalar_lea.vmem [#allocation2], %s217
          %s220 = ssub.s32 128, 128
          %221 = vsyncadd %s215, %s220
          %s222 = smul.addr %s22, 128
          %s223 = scalar_lea.hbm %s0, %s222
          %s225 = sshll.u32 %s218, 4
          %s226 = int_to_ptr.vmem [resolvable:$true] %s225
          %228 = dma.hbm_to_vmem [thread:$0]  %s223, 128, %s226, %s215
        $region32: #{tpu_custom_call.1} parent=27 // pred_fallthru
          _
      $region28: #{tpu_custom_call.1} parent=5 // pred_fallthru
        _
      %p229 = scmp.le.s32.totalorder 1, %s22
      %p230 = scmp.lt.s32.totalorder %s22, 3
      %p231 = pnand %p229, %p230
      %p232 = pneg %p231
      // Predicated region
      $region33: #{tpu_custom_call.1} parent=5 // pred_check
        _
      $region34: #{tpu_custom_call.1} parent=5 // pred_check_branch
        %234 = sbr.rel (%p231) target = $region36
      $region35: #{tpu_custom_call.1} parent=5 // pred_region
        %s235 = ssub.s32 %s22, 1
        %s236 = sand.u32 %s35, 1
        %s237 = scalar_lea.sflag [#allocation3], %s236
        %s238 = sand.u32 %s35, 1
        %s239 = smul.addr %s238, 8
        %s240 = scalar_lea.vmem [#allocation2], %s239
        // Predicated region
        $region37: #{tpu_custom_call.1} parent=35 // pred_check
          %p241 = pneg %p48
        $region38: #{tpu_custom_call.1} parent=35 // pred_check_branch
          %243 = sbr.rel (%p241) target = $region40
        $region39: #{tpu_custom_call.1} parent=35 // pred_region
          %244 = dma.done %s237, 128
        $region40: #{tpu_custom_call.1} parent=35 // pred_fallthru
          _
        // Predicated region
        $region41: #{tpu_custom_call.1} parent=35 // pred_check
          %p245 = pneg %p69
        $region42: #{tpu_custom_call.1} parent=35 // pred_check_branch
          %247 = sbr.rel (%p245) target = $region44
        $region43: #{tpu_custom_call.1} parent=35 // pred_region
          %248 = dma.done [#allocation6], 2048
        $region44: #{tpu_custom_call.1} parent=35 // pred_fallthru
          _
        // Predicated region
        $region45: #{tpu_custom_call.1} parent=35 // pred_check
          %p249 = pneg %p90
        $region46: #{tpu_custom_call.1} parent=35 // pred_check_branch
          %251 = sbr.rel (%p249) target = $region48
        $region47: #{tpu_custom_call.1} parent=35 // pred_region
          %252 = dma.done [#allocation6], 2048
        $region48: #{tpu_custom_call.1} parent=35 // pred_fallthru
          _
        %s253 = sand.u32 %s35, 1
        %s254 = scalar_lea.sflag [#allocation3], %s253
        %s255 = sand.u32 %s35, 1
        %s256 = smul.addr %s255, 8
        %s257 = scalar_lea.vmem [#allocation2], %s256
        %p258 = pneg %p48
        %p259 = pneg %p45
        %p260 = pneg %p69
        %p261 = pneg %p66
        %p262 = pneg %p90
        %p263 = pneg %p87
        %p264 = pneg %p111
        %p265 = pneg %p108
        %p266 = pneg %p137
        %p267 = pneg %p134
        %s268 = sand.u32 %s124, 1
        %s269 = scalar_lea.sflag [#allocation4], %s268
        %s270 = sand.u32 %s124, 1
        %s271 = smul.addr %s270, 8
        %s272 = scalar_lea.vmem [#allocation8], %s271
        %p273 = pneg %p163
        %p274 = pneg %p160
        %s275 = sand.u32 %s150, 1
        %s276 = scalar_lea.sflag [#allocation10], %s275
        %s277 = sand.u32 %s150, 1
        %s278 = smul.addr %s277, 8
        %s279 = scalar_lea.vmem [#allocation9], %s278
        %v280 = vld [vmem:[%s240] sm:$0xff]
        %v281 = vld [vmem:[#allocation5] sm:$0xff]
        %v282 = vld [vmem:[#allocation5 + $0x8] sm:$0xff]
        %v283 = vld [vmem:[#allocation5 + $0x10] sm:$0xff]
        %v284 = vld [vmem:[#allocation5 + $0x18] sm:$0xff]
        %v285 = vld [vmem:[#allocation5 + $0x20] sm:$0xff]
        %v286 = vld [vmem:[#allocation5 + $0x28] sm:$0xff]
        %v287 = vld [vmem:[#allocation5 + $0x30] sm:$0xff]
        %v288 = vld [vmem:[#allocation5 + $0x38] sm:$0xff]
        %v289 = vld [vmem:[#allocation5 + $0x40] sm:$0xff]
        %v290 = vld [vmem:[#allocation5 + $0x48] sm:$0xff]
        %v291 = vld [vmem:[#allocation5 + $0x50] sm:$0xff]
        %v292 = vld [vmem:[#allocation5 + $0x58] sm:$0xff]
        %v293 = vld [vmem:[#allocation5 + $0x60] sm:$0xff]
        %v294 = vld [vmem:[#allocation5 + $0x68] sm:$0xff]
        %v295 = vld [vmem:[#allocation5 + $0x70] sm:$0xff]
        %v296 = vld [vmem:[#allocation5 + $0x78] sm:$0xff]
        %v297 = vld [vmem:[#allocation7] sm:$0xff]
        %v298 = vld [vmem:[#allocation7 + $0x8] sm:$0xff]
        %v299 = vld [vmem:[#allocation7 + $0x10] sm:$0xff]
        %v300 = vld [vmem:[#allocation7 + $0x18] sm:$0xff]
        %v301 = vld [vmem:[#allocation7 + $0x20] sm:$0xff]
        %v302 = vld [vmem:[#allocation7 + $0x28] sm:$0xff]
        %v303 = vld [vmem:[#allocation7 + $0x30] sm:$0xff]
        %v304 = vld [vmem:[#allocation7 + $0x38] sm:$0xff]
        %v305 = vld [vmem:[#allocation7 + $0x40] sm:$0xff]
        %v306 = vld [vmem:[#allocation7 + $0x48] sm:$0xff]
        %v307 = vld [vmem:[#allocation7 + $0x50] sm:$0xff]
        %v308 = vld [vmem:[#allocation7 + $0x58] sm:$0xff]
        %v309 = vld [vmem:[#allocation7 + $0x60] sm:$0xff]
        %v310 = vld [vmem:[#allocation7 + $0x68] sm:$0xff]
        %v311 = vld [vmem:[#allocation7 + $0x70] sm:$0xff]
        %v312 = vld [vmem:[#allocation7 + $0x78] sm:$0xff]
        %v313 = vld [vmem:[%s3] sm:$0x1]
        %v315 = vlaneseq
        %v316 = vshrl.u32 %v315, 7
        %v317 = vsub.s32 0, %v316
        %v318 = vrot.slane %v313, %v317
        %320 = vmatprep.subr.mxu0 0.0
        %321 = vmatpush1.msra.mxu0 %v281
        %322 = vmatprep.subr.mxu0 0.0
        %323 = vmatpush1.msra.mxu0 %v282
        %324 = vmatprep.subr.mxu0 0.0
        %325 = vmatpush1.msra.mxu0 %v283
        %326 = vmatprep.subr.mxu0 0.0
        %327 = vmatpush1.msra.mxu0 %v284
        %328 = vmatprep.subr.mxu0 0.0
        %329 = vmatpush1.msra.mxu0 %v285
        %330 = vmatprep.subr.mxu0 0.0
        %331 = vmatpush1.msra.mxu0 %v286
        %332 = vmatprep.subr.mxu0 0.0
        %333 = vmatpush1.msra.mxu0 %v287
        %334 = vmatprep.subr.mxu0 0.0
        %335 = vmatpush1.msra.mxu0 %v288
        %336 = vmatprep.subr.mxu0 0.0
        %337 = vmatpush1.msra.mxu0 %v289
        %338 = vmatprep.subr.mxu0 0.0
        %339 = vmatpush1.msra.mxu0 %v290
        %340 = vmatprep.subr.mxu0 0.0
        %341 = vmatpush1.msra.mxu0 %v291
        %342 = vmatprep.subr.mxu0 0.0
        %343 = vmatpush1.msra.mxu0 %v292
        %344 = vmatprep.subr.mxu0 0.0
        %345 = vmatpush1.msra.mxu0 %v293
        %346 = vmatprep.subr.mxu0 0.0
        %347 = vmatpush1.msra.mxu0 %v294
        %348 = vmatprep.subr.mxu0 0.0
        %349 = vmatpush1.msra.mxu0 %v295
        %350 = vmatprep.subr.mxu0 0.0
        %351 = vmatpush1.msra.mxu0 %v296
        %352 = vmatprep.subr.mxu0 0.0
        %353 = vmatpush1.msra.mxu0 0.0
        %354 = vmatprep.subr.mxu0 0.0
        %355 = vmatpush1.msra.mxu0 0.0
        %356 = vmatprep.subr.mxu0 0.0
        %357 = vmatpush1.msra.mxu0 0.0
        %358 = vmatprep.subr.mxu0 0.0
        %359 = vmatpush1.msra.mxu0 0.0
        %360 = vmatprep.subr.mxu0 0.0
        %361 = vmatpush1.msra.mxu0 0.0
        %362 = vmatprep.subr.mxu0 0.0
        %363 = vmatpush1.msra.mxu0 0.0
        %364 = vmatprep.subr.mxu0 0.0
        %365 = vmatpush1.msra.mxu0 0.0
        %366 = vmatprep.subr.mxu0 0.0
        %367 = vmatpush1.msra.mxu0 0.0
        %368 = vmatprep.subr.mxu0 0.0
        %369 = vmatpush1.msra.mxu0 0.0
        %370 = vmatprep.subr.mxu0 0.0
        %371 = vmatpush1.msra.mxu0 0.0
        %372 = vmatprep.subr.mxu0 0.0
        %373 = vmatpush1.msra.mxu0 0.0
        %374 = vmatprep.subr.mxu0 0.0
        %375 = vmatpush1.msra.mxu0 0.0
        %376 = vmatprep.subr.mxu0 0.0
        %377 = vmatpush1.msra.mxu0 0.0
        %378 = vmatprep.subr.mxu0 0.0
        %379 = vmatpush1.msra.mxu0 0.0
        %380 = vmatprep.subr.mxu0 0.0
        %381 = vmatpush1.msra.mxu0 0.0
        %382 = vmatprep.subr.mxu0 0.0
        %383 = vmatpush1.msra.mxu0 0.0
        %384 = vmatprep.mubr.f32.mxu0 0.0
        %385 = vmatmul.mubr.f32.gmra.mrb[0].mxu0 %v280
        %v386 = vpop.f32.mrb[0].mxu0
        %v387 = vadd.f32 %v318, %v386
        %v388 = vpop.f32.mrb[0].mxu0
        %389 = vdwg.mxu0
        %390 = vmax.xlane.f32.xlu0 %v387
        %v391 = vpop.xlane.xlu0 %390
        %v392 = vsub.f32 %v387, %v391
        %v393 = vmul.f32 %v392, 1.442695
        %v394 = vpow.pop %v393
        %395 = vadd.xlane.f32.xlu0 %v394
        %v396 = vpop.xlane.xlu0 %395
        %v397 = vrcp.pop %v396
        %v398 = vmul.f32 %v394, %v397
        %v399 = vsub.f32 %v398, 0.0025
        %vm400 = vcmp.gt.f32.partialorder %v398, 0.0025
        %v401 = vsel %vm400, %v399, 1.0
        %v402 = vadd.f32 %v401, 1e-12
        %v403 = vmul.f32 %v398, %v399
        %v404 = vrcp.pop %v402
        %v405 = vmul.f32 %v403, %v404
        %v406 = vsel %vm400, %v405, 0.0
        %407 = vadd.xlane.f32.xlu0 %v406
        %v408 = vpop.xlane.xlu0 %407
        %v409 = vmax.f32 %v408, 1e-12
        %v410 = vrcp.pop %v409
        %v411 = vmul.f32 %v406, %v410
        %412 = vmatprep.subr.mxu0 0.0
        %413 = vmatpush1.msra.mxu0 %v297
        %414 = vmatprep.subr.mxu0 0.0
        %415 = vmatpush1.msra.mxu0 %v298
        %416 = vmatprep.subr.mxu0 0.0
        %417 = vmatpush1.msra.mxu0 %v299
        %418 = vmatprep.subr.mxu0 0.0
        %419 = vmatpush1.msra.mxu0 %v300
        %420 = vmatprep.subr.mxu0 0.0
        %421 = vmatpush1.msra.mxu0 %v301
        %422 = vmatprep.subr.mxu0 0.0
        %423 = vmatpush1.msra.mxu0 %v302
        %424 = vmatprep.subr.mxu0 0.0
        %425 = vmatpush1.msra.mxu0 %v303
        %426 = vmatprep.subr.mxu0 0.0
        %427 = vmatpush1.msra.mxu0 %v304
        %428 = vmatprep.subr.mxu0 0.0
        %429 = vmatpush1.msra.mxu0 %v305
        %430 = vmatprep.subr.mxu0 0.0
        %431 = vmatpush1.msra.mxu0 %v306
        %432 = vmatprep.subr.mxu0 0.0
        %433 = vmatpush1.msra.mxu0 %v307
        %434 = vmatprep.subr.mxu0 0.0
        %435 = vmatpush1.msra.mxu0 %v308
        %436 = vmatprep.subr.mxu0 0.0
        %437 = vmatpush1.msra.mxu0 %v309
        %438 = vmatprep.subr.mxu0 0.0
        %439 = vmatpush1.msra.mxu0 %v310
        %440 = vmatprep.subr.mxu0 0.0
        %441 = vmatpush1.msra.mxu0 %v311
        %442 = vmatprep.subr.mxu0 0.0
        %443 = vmatpush1.msra.mxu0 %v312
        %444 = vmatprep.subr.mxu0 0.0
        %445 = vmatpush1.msra.mxu0 0.0
        %446 = vmatprep.subr.mxu0 0.0
        %447 = vmatpush1.msra.mxu0 0.0
        %448 = vmatprep.subr.mxu0 0.0
        %449 = vmatpush1.msra.mxu0 0.0
        %450 = vmatprep.subr.mxu0 0.0
        %451 = vmatpush1.msra.mxu0 0.0
        %452 = vmatprep.subr.mxu0 0.0
        %453 = vmatpush1.msra.mxu0 0.0
        %454 = vmatprep.subr.mxu0 0.0
        %455 = vmatpush1.msra.mxu0 0.0
        %456 = vmatprep.subr.mxu0 0.0
        %457 = vmatpush1.msra.mxu0 0.0
        %458 = vmatprep.subr.mxu0 0.0
        %459 = vmatpush1.msra.mxu0 0.0
        %460 = vmatprep.subr.mxu0 0.0
        %461 = vmatpush1.msra.mxu0 0.0
        %462 = vmatprep.subr.mxu0 0.0
        %463 = vmatpush1.msra.mxu0 0.0
        %464 = vmatprep.subr.mxu0 0.0
        %465 = vmatpush1.msra.mxu0 0.0
        %466 = vmatprep.subr.mxu0 0.0
        %467 = vmatpush1.msra.mxu0 0.0
        %468 = vmatprep.subr.mxu0 0.0
        %469 = vmatpush1.msra.mxu0 0.0
        %470 = vmatprep.subr.mxu0 0.0
        %471 = vmatpush1.msra.mxu0 0.0
        %472 = vmatprep.subr.mxu0 0.0
        %473 = vmatpush1.msra.mxu0 0.0
        %474 = vmatprep.subr.mxu0 0.0
        %475 = vmatpush1.msra.mxu0 0.0
        %476 = vmatprep.mubr.f32.mxu0 0.0
        %477 = vmatmul.mubr.f32.gmra.mrb[0].mxu0 %v411
        %v478 = vpop.f32.mrb[0].mxu0
        %v479 = vadd.f32 0.0, %v478
        %v480 = vpop.f32.mrb[0].mxu0
        %481 = vdwg.mxu0
        %482 = vst [vmem:[%s272] sm:$0xff] %v479
        %483 = vst [vmem:[%s279] sm:$0xff] %v411
        %s484 = sand.u32 %s124, 1
        %s485 = scalar_lea.sflag [#allocation4], %s484
        %s486 = sand.u32 %s124, 1
        %s487 = smul.addr %s486, 8
        %s488 = scalar_lea.vmem [#allocation8], %s487
        %s489 = sand.u32 %s150, 1
        %s490 = scalar_lea.sflag [#allocation10], %s489
        %s491 = sand.u32 %s150, 1
        %s492 = smul.addr %s491, 8
        %s493 = scalar_lea.vmem [#allocation9], %s492
        // Predicated region
        $region49: #{tpu_custom_call.1} parent=35 // pred_check
          %p494 = pneg %p134
        $region50: #{tpu_custom_call.1} parent=35 // pred_check_branch
          %496 = sbr.rel (%p494) target = $region52
        $region51: #{tpu_custom_call.1} parent=35 // pred_region
          %s498 = ssub.s32 128, 128
          %499 = vsyncadd %s485, %s498
          %s500 = smul.addr %s27, 128
          %s501 = scalar_lea.hbm %s4, %s500
          %s503 = sshll.u32 %s488, 4
          %s504 = int_to_ptr.vmem [resolvable:$true] %s503
          %506 = dma.vmem_to_hbm [thread:$0]  %s504, 128, %s501, %s485
        $region52: #{tpu_custom_call.1} parent=35 // pred_fallthru
          _
        // Predicated region
        $region53: #{tpu_custom_call.1} parent=35 // pred_check
          %p507 = pneg %p160
        $region54: #{tpu_custom_call.1} parent=35 // pred_check_branch
          %509 = sbr.rel (%p507) target = $region56
        $region55: #{tpu_custom_call.1} parent=35 // pred_region
          %s511 = ssub.s32 128, 128
          %512 = vsyncadd %s490, %s511
          %s513 = smul.addr %s27, 128
          %s514 = scalar_lea.hbm %s5, %s513
          %s516 = sshll.u32 %s493, 4
          %s517 = int_to_ptr.vmem [resolvable:$true] %s516
          %519 = dma.vmem_to_hbm [thread:$0]  %s517, 128, %s514, %s490
        $region56: #{tpu_custom_call.1} parent=35 // pred_fallthru
          _
      $region36: #{tpu_custom_call.1} parent=5 // pred_fallthru
        _
      %p520 = scmp.le.s32.totalorder 2, %s22
      // Predicated region
      $region57: #{tpu_custom_call.1} parent=5 // pred_check
        %p521 = pneg %p520
      $region58: #{tpu_custom_call.1} parent=5 // pred_check_branch
        %523 = sbr.rel (%p521) target = $region60
      $region59: #{tpu_custom_call.1} parent=5 // pred_region
        %s524 = ssub.s32 %s22, 2
        // Predicated region
        $region61: #{tpu_custom_call.1} parent=59 // pred_check
          %p525 = pneg %p140
        $region62: #{tpu_custom_call.1} parent=59 // pred_check_branch
          %527 = sbr.rel (%p525) target = $region64
        $region63: #{tpu_custom_call.1} parent=59 // pred_region
          %s528 = sand.u32 %s125, 1
          %s529 = scalar_lea.sflag [#allocation4], %s528
          %s530 = sand.u32 %s125, 1
          %s531 = smul.addr %s530, 8
          %s532 = scalar_lea.vmem [#allocation8], %s531
          %533 = dma.done %s529, 128
        $region64: #{tpu_custom_call.1} parent=59 // pred_fallthru
          _
        // Predicated region
        $region65: #{tpu_custom_call.1} parent=59 // pred_check
          %p534 = pneg %p166
        $region66: #{tpu_custom_call.1} parent=59 // pred_check_branch
          %536 = sbr.rel (%p534) target = $region68
        $region67: #{tpu_custom_call.1} parent=59 // pred_region
          %s537 = sand.u32 %s151, 1
          %s538 = scalar_lea.sflag [#allocation10], %s537
          %s539 = sand.u32 %s151, 1
          %s540 = smul.addr %s539, 8
          %s541 = scalar_lea.vmem [#allocation9], %s540
          %542 = dma.done %s538, 128
        $region68: #{tpu_custom_call.1} parent=59 // pred_fallthru
          _
      $region60: #{tpu_custom_call.1} parent=5 // pred_fallthru
        _
    $region6: #{tpu_custom_call.1} parent=1 // loop_footer
      %s26 = sadd.s32 1, %s22
    $region7: #{tpu_custom_call.1} parent=1 // loop_footer_branch
      %21 = sbr.rel target = $region3
    $region8: #{tpu_custom_call.1} parent=1 // loop_exit
      _
    %543 = vsyncpa [#allocation3], 1
    %s544 = scalar_lea.sflag [#allocation3], 1
    %545 = vsyncpa %s544, 1
    %546 = vsyncpa [#allocation6], 1
    %547 = vsyncpa [#allocation4], 1
    %s548 = scalar_lea.sflag [#allocation4], 1
    %549 = vsyncpa %s548, 1
    %550 = vsyncpa [#allocation10], 1
    %s551 = scalar_lea.sflag [#allocation10], 1
    %552 = vsyncpa %s551, 1

// kernel: tpu_custom_call.1
$region0: #{tpu_custom_call.1}
  #allocation0 [shape = 'u32[]', space=smem, size = 0x4, offset = 0x4, fixed_abs, tag = 'smem constant byte address 0x4 - core index']
  #allocation1 [shape = 'u32[144,128]{1,0:T(1,128)}', space=vmem, size = 0x12000, scoped, tag = 'internal scratch']
  %s0 = inlined_call_operand.hbm [shape: f32[16,128], index: 0, kind: input, shape index: {}]
  %s1 = inlined_call_operand.hbm [shape: f32[128,128], index: 1, kind: input, shape index: {}]
  %s2 = inlined_call_operand.hbm [shape: f32[128,128], index: 2, kind: input, shape index: {}]
  %s3 = inlined_call_operand.vmem [shape: f32[1,128], index: 3, kind: input, shape index: {}]
  %s4 = inlined_call_operand.hbm [shape: f32[16,128], index: 4, kind: output, shape index: {0}]
  %s5 = inlined_call_operand.hbm [shape: f32[16,128], index: 5, kind: output, shape index: {1}]
  %6 = xla_tuple %s4, %s5
  %s7 = sld [smem:[#allocation0]]
  $region69: #{tpu_custom_call.1} parent=0
    _
  %s9 = ssub.s32 1, %s7
  %s10 = scalar_select 0, %s9, %s7
  $region1: #{tpu_custom_call.1} parent=0
    #allocation2 [shape = 'u8[8192]{0}', space=vmem, size = 0x2000, scoped, tag = 'input window, operand 0']
    #allocation3 [shape = 's32[2]{0}', space=sflag, size = 0x8, scoped, tag = 'scoped memory for tpu_custom_call.1']
    #allocation4 [shape = 's32[2]{0}', space=sflag, size = 0x8, scoped, tag = 'scoped memory for tpu_custom_call.1']
    #allocation5 [shape = 'u8[65536]{0}', space=vmem, size = 0x10000, scoped, tag = 'input window, operand 1, single buffered']
    #allocation6 [shape = 's32[1]{0}', space=sflag, size = 0x4, scoped, tag = 'scoped memory for tpu_custom_call.1']
    #allocation7 [shape = 'u8[65536]{0}', space=vmem, size = 0x10000, scoped, tag = 'input window, operand 2, single buffered']
    #allocation8 [shape = 'u8[8192]{0}', space=vmem, size = 0x2000, scoped, tag = 'output window, operand 0']
    #allocation9 [shape = 'u8[8192]{0}', space=vmem, size = 0x2000, scoped, tag = 'output window, operand 1']
    #allocation10 [shape = 's32[2]{0}', space=sflag, size = 0x8, scoped, tag = 'scoped memory for tpu_custom_call.1']
    %11 = vsyncpa [#allocation3], 0
    %s12 = scalar_lea.sflag [#allocation3], 1
    %13 = vsyncpa %s12, 0
    %14 = vsyncpa [#allocation6], 0
    %15 = vsyncpa [#allocation4], 0
    %s16 = scalar_lea.sflag [#allocation4], 1
    %17 = vsyncpa %s16, 0
    %18 = vsyncpa [#allocation10], 0
    %s19 = scalar_lea.sflag [#allocation10], 1
    %20 = vsyncpa %s19, 0
    loop: start=0, step=1, limit=4
    $region2: #{tpu_custom_call.1} parent=1 // loop_pre_header
      _
    $region3: #{tpu_custom_call.1} parent=1 // loop_header
      %s22 = sphi 0, %s26
      %p23 = scmp.ge.s32.totalorder %s22, 4
      %s32 = sphi 0, %s34
      %s35 = sphi 0, %s32
      %s36 = sphi 0, %s35
      %s52 = sphi 0, %s36
      %s56 = sphi 0, %s56
      %s58 = sphi 0, %s56
      %s59 = sphi 0, %s58
      %s73 = sphi 0, %s59
      %s77 = sphi 0, %s77
      %s79 = sphi 0, %s77
      %s80 = sphi 0, %s79
      %s94 = sphi 0, %s80
      %s98 = sphi 0, %s98
      %s100 = sphi 0, %s98
      %s101 = sphi 0, %s100
      %s115 = sphi 0, %s101
      %s121 = sphi 0, %s123
      %s124 = sphi 0, %s121
      %s125 = sphi 0, %s124
      %s141 = sphi 0, %s125
      %s147 = sphi 0, %s149
      %s150 = sphi 0, %s147
      %s151 = sphi 0, %s150
      %s167 = sphi 0, %s151
    $region4: #{tpu_custom_call.1} parent=1 // loop_header_branch
      %25 = sbr.rel (%p23) target = $region8
    $region5: #{tpu_custom_call.1} parent=1 // loop_body
      %s27 = ssub.s32 %s22, 1
      %s28 = ssub.s32 %s22, 2
      %s29 = sadd.s32 %s22, 1
      %s30 = ssub.s32 %s22, %s29
      %p31 = scmp.eq.s32.totalorder %s30, 0
      %s33 = sadd.s32 %s32, 1
      %s34 = scalar_select %p31, %s32, %s33
      %p37 = pneg %p31
      %p38 = scmp.eq.s32.totalorder %s22, 1
      %p39 = por %p37, %p38
      %p40 = scmp.ne.s32.totalorder %s32, %s35
      %p41 = scmp.eq.s32.totalorder %s22, 0
      %p42 = por %p40, %p41
      %p43 = scmp.ne.s32.totalorder %s32, %s35
      %p44 = scmp.eq.s32.totalorder %s27, 1
      %p45 = por %p43, %p44
      %p46 = scmp.ne.s32.totalorder %s35, %s36
      %p47 = scmp.eq.s32.totalorder %s27, 0
      %p48 = por %p46, %p47
      %p49 = scmp.ne.s32.totalorder %s35, %s36
      %p50 = scmp.eq.s32.totalorder %s28, 1
      %p51 = por %p49, %p50
      %p53 = scmp.ne.s32.totalorder %s36, %s52
      %p54 = scmp.eq.s32.totalorder %s28, 0
      %p55 = por %p53, %p54
      %s57 = sadd.s32 %s56, 1
      %p60 = scmp.eq.s32.totalorder %s22, 1
      %p61 = scmp.ne.s32.totalorder %s56, %s58
      %p62 = scmp.eq.s32.totalorder %s22, 0
      %p63 = por %p61, %p62
      %p64 = scmp.ne.s32.totalorder %s56, %s58
      %p65 = scmp.eq.s32.totalorder %s27, 1
      %p66 = por %p64, %p65
      %p67 = scmp.ne.s32.totalorder %s58, %s59
      %p68 = scmp.eq.s32.totalorder %s27, 0
      %p69 = por %p67, %p68
      %p70 = scmp.ne.s32.totalorder %s58, %s59
      %p71 = scmp.eq.s32.totalorder %s28, 1
      %p72 = por %p70, %p71
      %p74 = scmp.ne.s32.totalorder %s59, %s73
      %p75 = scmp.eq.s32.totalorder %s28, 0
      %p76 = por %p74, %p75
      %s78 = sadd.s32 %s77, 1
      %p81 = scmp.eq.s32.totalorder %s22, 1
      %p82 = scmp.ne.s32.totalorder %s77, %s79
      %p83 = scmp.eq.s32.totalorder %s22, 0
      %p84 = por %p82, %p83
      %p85 = scmp.ne.s32.totalorder %s77, %s79
      %p86 = scmp.eq.s32.totalorder %s27, 1
      %p87 = por %p85, %p86
      %p88 = scmp.ne.s32.totalorder %s79, %s80
      %p89 = scmp.eq.s32.totalorder %s27, 0
      %p90 = por %p88, %p89
      %p91 = scmp.ne.s32.totalorder %s79, %s80
      %p92 = scmp.eq.s32.totalorder %s28, 1
      %p93 = por %p91, %p92
      %p95 = scmp.ne.s32.totalorder %s80, %s94
      %p96 = scmp.eq.s32.totalorder %s28, 0
      %p97 = por %p95, %p96
      %s99 = sadd.s32 %s98, 1
      %p102 = scmp.eq.s32.totalorder %s22, 1
      %p103 = scmp.ne.s32.totalorder %s98, %s100
      %p104 = scmp.eq.s32.totalorder %s22, 0
      %p105 = por %p103, %p104
      %p106 = scmp.ne.s32.totalorder %s98, %s100
      %p107 = scmp.eq.s32.totalorder %s27, 1
      %p108 = por %p106, %p107
      %p109 = scmp.ne.s32.totalorder %s100, %s101
      %p110 = scmp.eq.s32.totalorder %s27, 0
      %p111 = por %p109, %p110
      %p112 = scmp.ne.s32.totalorder %s100, %s101
      %p113 = scmp.eq.s32.totalorder %s28, 1
      %p114 = por %p112, %p113
      %p116 = scmp.ne.s32.totalorder %s101, %s115
      %p117 = scmp.eq.s32.totalorder %s28, 0
      %p118 = por %p116, %p117
      %s119 = ssub.s32 %s22, %s29
      %p120 = scmp.eq.s32.totalorder %s119, 0
      %s122 = sadd.s32 %s121, 1
      %s123 = scalar_select %p120, %s121, %s122
      %p126 = pneg %p120
      %p127 = scmp.eq.s32.totalorder %s22, 1
      %p128 = por %p126, %p127
      %p129 = scmp.ne.s32.totalorder %s121, %s124
      %p130 = scmp.eq.s32.totalorder %s22, 0
      %p131 = por %p129, %p130
      %p132 = scmp.ne.s32.totalorder %s121, %s124
      %p133 = scmp.eq.s32.totalorder %s27, 1
      %p134 = por %p132, %p133
      %p135 = scmp.ne.s32.totalorder %s124, %s125
      %p136 = scmp.eq.s32.totalorder %s27, 0
      %p137 = por %p135, %p136
      %p138 = scmp.ne.s32.totalorder %s124, %s125
      %p139 = scmp.eq.s32.totalorder %s28, 1
      %p140 = por %p138, %p139
      %p142 = scmp.ne.s32.totalorder %s125, %s141
      %p143 = scmp.eq.s32.totalorder %s28, 0
      %p144 = por %p142, %p143
      %s145 = ssub.s32 %s22, %s29
      %p146 = scmp.eq.s32.totalorder %s145, 0
      %s148 = sadd.s32 %s147, 1
      %s149 = scalar_select %p146, %s147, %s148
      %p152 = pneg %p146
      %p153 = scmp.eq.s32.totalorder %s22, 1
      %p154 = por %p152, %p153
      %p155 = scmp.ne.s32.totalorder %s147, %s150
      %p156 = scmp.eq.s32.totalorder %s22, 0
      %p157 = por %p155, %p156
      %p158 = scmp.ne.s32.totalorder %s147, %s150
      %p159 = scmp.eq.s32.totalorder %s27, 1
      %p160 = por %p158, %p159
      %p161 = scmp.ne.s32.totalorder %s150, %s151
      %p162 = scmp.eq.s32.totalorder %s27, 0
      %p163 = por %p161, %p162
      %p164 = scmp.ne.s32.totalorder %s150, %s151
      %p165 = scmp.eq.s32.totalorder %s28, 1
      %p166 = por %p164, %p165
      %p168 = scmp.ne.s32.totalorder %s151, %s167
      %p169 = scmp.eq.s32.totalorder %s28, 0
      %p170 = por %p168, %p169
      %p171 = scmp.le.s32.totalorder 1, %s22
      %p172 = scmp.lt.s32.totalorder %s22, 3
      %p173 = pnand %p171, %p172
      %p174 = pneg %p173
      // Predicated region
      $region9: #{tpu_custom_call.1} parent=5 // pred_check
        _
      $region10: #{tpu_custom_call.1} parent=5 // pred_check_branch
        %176 = sbr.rel (%p173) target = $region12
      $region11: #{tpu_custom_call.1} parent=5 // pred_region
        %s177 = ssub.s32 %s22, 1
        // Predicated region
        $region13: #{tpu_custom_call.1} parent=11 // pred_check
          %p178 = pneg %p69
        $region14: #{tpu_custom_call.1} parent=11 // pred_check_branch
          %180 = sbr.rel (%p178) target = $region16
        $region15: #{tpu_custom_call.1} parent=11 // pred_region
          %s182 = ssub.s32 2048, 2048
          %183 = vsyncadd [#allocation6], %s182
          %s184 = sshll.u32 [#allocation5], 4
          %s185 = int_to_ptr.vmem [resolvable:$true] %s184
          %190 = dma.hbm_to_vmem [thread:$0]  %s1, 2048, %s185, [#allocation6], 128, 128, 8
        $region16: #{tpu_custom_call.1} parent=11 // pred_fallthru
          _
        // Predicated region
        $region17: #{tpu_custom_call.1} parent=11 // pred_check
          %p191 = pneg %p90
        $region18: #{tpu_custom_call.1} parent=11 // pred_check_branch
          %193 = sbr.rel (%p191) target = $region20
        $region19: #{tpu_custom_call.1} parent=11 // pred_region
          %s195 = ssub.s32 2048, 2048
          %196 = vsyncadd [#allocation6], %s195
          %s197 = sshll.u32 [#allocation7], 4
          %s198 = int_to_ptr.vmem [resolvable:$true] %s197
          %203 = dma.hbm_to_vmem [thread:$0]  %s2, 2048, %s198, [#allocation6], 128, 128, 8
        $region20: #{tpu_custom_call.1} parent=11 // pred_fallthru
          _
        // Predicated region
        $region21: #{tpu_custom_call.1} parent=11 // pred_check
          %p204 = pneg %p111
        $region22: #{tpu_custom_call.1} parent=11 // pred_check_branch
          %206 = sbr.rel (%p204) target = $region24
        $region23: #{tpu_custom_call.1} parent=11 // pred_region
          _
        $region24: #{tpu_custom_call.1} parent=11 // pred_fallthru
          _
      $region12: #{tpu_custom_call.1} parent=5 // pred_fallthru
        _
      %p207 = scmp.lt.s32.totalorder %s22, 2
      // Predicated region
      $region25: #{tpu_custom_call.1} parent=5 // pred_check
        %p208 = pneg %p207
      $region26: #{tpu_custom_call.1} parent=5 // pred_check_branch
        %210 = sbr.rel (%p208) target = $region28
      $region27: #{tpu_custom_call.1} parent=5 // pred_region
        // Predicated region
        $region29: #{tpu_custom_call.1} parent=27 // pred_check
          %p211 = pneg %p42
        $region30: #{tpu_custom_call.1} parent=27 // pred_check_branch
          %213 = sbr.rel (%p211) target = $region32
        $region31: #{tpu_custom_call.1} parent=27 // pred_region
          %s214 = sand.u32 %s32, 1
          %s215 = scalar_lea.sflag [#allocation3], %s214
          %s216 = sand.u32 %s32, 1
          %s217 = smul.addr %s216, 8
          %s218 = scalar_lea.vmem [#allocation2], %s217
          %s220 = ssub.s32 128, 128
          %221 = vsyncadd %s215, %s220
          %s222 = smul.addr %s22, 128
          %s223 = scalar_lea.hbm %s0, %s222
          %s225 = sshll.u32 %s218, 4
          %s226 = int_to_ptr.vmem [resolvable:$true] %s225
          %228 = dma.hbm_to_vmem [thread:$0]  %s223, 128, %s226, %s215
        $region32: #{tpu_custom_call.1} parent=27 // pred_fallthru
          _
      $region28: #{tpu_custom_call.1} parent=5 // pred_fallthru
        _
      %p229 = scmp.le.s32.totalorder 1, %s22
      %p230 = scmp.lt.s32.totalorder %s22, 3
      %p231 = pnand %p229, %p230
      %p232 = pneg %p231
      // Predicated region
      $region33: #{tpu_custom_call.1} parent=5 // pred_check
        _
      $region34: #{tpu_custom_call.1} parent=5 // pred_check_branch
        %234 = sbr.rel (%p231) target = $region36
      $region35: #{tpu_custom_call.1} parent=5 // pred_region
        %s235 = ssub.s32 %s22, 1
        %s236 = sand.u32 %s35, 1
        %s237 = scalar_lea.sflag [#allocation3], %s236
        %s238 = sand.u32 %s35, 1
        %s239 = smul.addr %s238, 8
        %s240 = scalar_lea.vmem [#allocation2], %s239
        // Predicated region
        $region37: #{tpu_custom_call.1} parent=35 // pred_check
          %p241 = pneg %p48
        $region38: #{tpu_custom_call.1} parent=35 // pred_check_branch
          %243 = sbr.rel (%p241) target = $region40
        $region39: #{tpu_custom_call.1} parent=35 // pred_region
          %244 = dma.done %s237, 128
        $region40: #{tpu_custom_call.1} parent=35 // pred_fallthru
          _
        // Predicated region
        $region41: #{tpu_custom_call.1} parent=35 // pred_check
          %p245 = pneg %p69
        $region42: #{tpu_custom_call.1} parent=35 // pred_check_branch
          %247 = sbr.rel (%p245) target = $region44
        $region43: #{tpu_custom_call.1} parent=35 // pred_region
          %248 = dma.done [#allocation6], 2048
        $region44: #{tpu_custom_call.1} parent=35 // pred_fallthru
          _
        // Predicated region
        $region45: #{tpu_custom_call.1} parent=35 // pred_check
          %p249 = pneg %p90
        $region46: #{tpu_custom_call.1} parent=35 // pred_check_branch
          %251 = sbr.rel (%p249) target = $region48
        $region47: #{tpu_custom_call.1} parent=35 // pred_region
          %252 = dma.done [#allocation6], 2048
        $region48: #{tpu_custom_call.1} parent=35 // pred_fallthru
          _
        %s253 = sand.u32 %s35, 1
        %s254 = scalar_lea.sflag [#allocation3], %s253
        %s255 = sand.u32 %s35, 1
        %s256 = smul.addr %s255, 8
        %s257 = scalar_lea.vmem [#allocation2], %s256
        %p258 = pneg %p48
        %p259 = pneg %p45
        %p260 = pneg %p69
        %p261 = pneg %p66
        %p262 = pneg %p90
        %p263 = pneg %p87
        %p264 = pneg %p111
        %p265 = pneg %p108
        %p266 = pneg %p137
        %p267 = pneg %p134
        %s268 = sand.u32 %s124, 1
        %s269 = scalar_lea.sflag [#allocation4], %s268
        %s270 = sand.u32 %s124, 1
        %s271 = smul.addr %s270, 8
        %s272 = scalar_lea.vmem [#allocation8], %s271
        %p273 = pneg %p163
        %p274 = pneg %p160
        %s275 = sand.u32 %s150, 1
        %s276 = scalar_lea.sflag [#allocation10], %s275
        %s277 = sand.u32 %s150, 1
        %s278 = smul.addr %s277, 8
        %s279 = scalar_lea.vmem [#allocation9], %s278
        %v280 = vld [vmem:[%s240] sm:$0xff]
        %v281 = vld [vmem:[#allocation5] sm:$0xff]
        %v282 = vld [vmem:[#allocation5 + $0x8] sm:$0xff]
        %v283 = vld [vmem:[#allocation5 + $0x10] sm:$0xff]
        %v284 = vld [vmem:[#allocation5 + $0x18] sm:$0xff]
        %v285 = vld [vmem:[#allocation5 + $0x20] sm:$0xff]
        %v286 = vld [vmem:[#allocation5 + $0x28] sm:$0xff]
        %v287 = vld [vmem:[#allocation5 + $0x30] sm:$0xff]
        %v288 = vld [vmem:[#allocation5 + $0x38] sm:$0xff]
        %v289 = vld [vmem:[#allocation5 + $0x40] sm:$0xff]
        %v290 = vld [vmem:[#allocation5 + $0x48] sm:$0xff]
        %v291 = vld [vmem:[#allocation5 + $0x50] sm:$0xff]
        %v292 = vld [vmem:[#allocation5 + $0x58] sm:$0xff]
        %v293 = vld [vmem:[#allocation5 + $0x60] sm:$0xff]
        %v294 = vld [vmem:[#allocation5 + $0x68] sm:$0xff]
        %v295 = vld [vmem:[#allocation5 + $0x70] sm:$0xff]
        %v296 = vld [vmem:[#allocation5 + $0x78] sm:$0xff]
        %v297 = vld [vmem:[#allocation7] sm:$0xff]
        %v298 = vld [vmem:[#allocation7 + $0x8] sm:$0xff]
        %v299 = vld [vmem:[#allocation7 + $0x10] sm:$0xff]
        %v300 = vld [vmem:[#allocation7 + $0x18] sm:$0xff]
        %v301 = vld [vmem:[#allocation7 + $0x20] sm:$0xff]
        %v302 = vld [vmem:[#allocation7 + $0x28] sm:$0xff]
        %v303 = vld [vmem:[#allocation7 + $0x30] sm:$0xff]
        %v304 = vld [vmem:[#allocation7 + $0x38] sm:$0xff]
        %v305 = vld [vmem:[#allocation7 + $0x40] sm:$0xff]
        %v306 = vld [vmem:[#allocation7 + $0x48] sm:$0xff]
        %v307 = vld [vmem:[#allocation7 + $0x50] sm:$0xff]
        %v308 = vld [vmem:[#allocation7 + $0x58] sm:$0xff]
        %v309 = vld [vmem:[#allocation7 + $0x60] sm:$0xff]
        %v310 = vld [vmem:[#allocation7 + $0x68] sm:$0xff]
        %v311 = vld [vmem:[#allocation7 + $0x70] sm:$0xff]
        %v312 = vld [vmem:[#allocation7 + $0x78] sm:$0xff]
        %v313 = vld [vmem:[%s3] sm:$0x1]
        %v315 = vlaneseq
        %v316 = vshrl.u32 %v315, 7
        %v317 = vsub.s32 0, %v316
        %v318 = vrot.slane %v313, %v317
        %320 = vmatprep.subr.mxu0 0.0
        %321 = vmatpush1.msra.mxu0 %v281
        %322 = vmatprep.subr.mxu0 0.0
        %323 = vmatpush1.msra.mxu0 %v282
        %324 = vmatprep.subr.mxu0 0.0
        %325 = vmatpush1.msra.mxu0 %v283
        %326 = vmatprep.subr.mxu0 0.0
        %327 = vmatpush1.msra.mxu0 %v284
        %328 = vmatprep.subr.mxu0 0.0
        %329 = vmatpush1.msra.mxu0 %v285
        %330 = vmatprep.subr.mxu0 0.0
        %331 = vmatpush1.msra.mxu0 %v286
        %332 = vmatprep.subr.mxu0 0.0
        %333 = vmatpush1.msra.mxu0 %v287
        %334 = vmatprep.subr.mxu0 0.0
        %335 = vmatpush1.msra.mxu0 %v288
        %336 = vmatprep.subr.mxu0 0.0
        %337 = vmatpush1.msra.mxu0 %v289
        %338 = vmatprep.subr.mxu0 0.0
        %339 = vmatpush1.msra.mxu0 %v290
        %340 = vmatprep.subr.mxu0 0.0
        %341 = vmatpush1.msra.mxu0 %v291
        %342 = vmatprep.subr.mxu0 0.0
        %343 = vmatpush1.msra.mxu0 %v292
        %344 = vmatprep.subr.mxu0 0.0
        %345 = vmatpush1.msra.mxu0 %v293
        %346 = vmatprep.subr.mxu0 0.0
        %347 = vmatpush1.msra.mxu0 %v294
        %348 = vmatprep.subr.mxu0 0.0
        %349 = vmatpush1.msra.mxu0 %v295
        %350 = vmatprep.subr.mxu0 0.0
        %351 = vmatpush1.msra.mxu0 %v296
        %352 = vmatprep.subr.mxu0 0.0
        %353 = vmatpush1.msra.mxu0 0.0
        %354 = vmatprep.subr.mxu0 0.0
        %355 = vmatpush1.msra.mxu0 0.0
        %356 = vmatprep.subr.mxu0 0.0
        %357 = vmatpush1.msra.mxu0 0.0
        %358 = vmatprep.subr.mxu0 0.0
        %359 = vmatpush1.msra.mxu0 0.0
        %360 = vmatprep.subr.mxu0 0.0
        %361 = vmatpush1.msra.mxu0 0.0
        %362 = vmatprep.subr.mxu0 0.0
        %363 = vmatpush1.msra.mxu0 0.0
        %364 = vmatprep.subr.mxu0 0.0
        %365 = vmatpush1.msra.mxu0 0.0
        %366 = vmatprep.subr.mxu0 0.0
        %367 = vmatpush1.msra.mxu0 0.0
        %368 = vmatprep.subr.mxu0 0.0
        %369 = vmatpush1.msra.mxu0 0.0
        %370 = vmatprep.subr.mxu0 0.0
        %371 = vmatpush1.msra.mxu0 0.0
        %372 = vmatprep.subr.mxu0 0.0
        %373 = vmatpush1.msra.mxu0 0.0
        %374 = vmatprep.subr.mxu0 0.0
        %375 = vmatpush1.msra.mxu0 0.0
        %376 = vmatprep.subr.mxu0 0.0
        %377 = vmatpush1.msra.mxu0 0.0
        %378 = vmatprep.subr.mxu0 0.0
        %379 = vmatpush1.msra.mxu0 0.0
        %380 = vmatprep.subr.mxu0 0.0
        %381 = vmatpush1.msra.mxu0 0.0
        %382 = vmatprep.subr.mxu0 0.0
        %383 = vmatpush1.msra.mxu0 0.0
        %384 = vmatprep.mubr.f32.mxu0 0.0
        %385 = vmatmul.mubr.f32.gmra.mrb[0].mxu0 %v280
        %v386 = vpop.f32.mrb[0].mxu0
        %v387 = vadd.f32 %v318, %v386
        %v388 = vpop.f32.mrb[0].mxu0
        %389 = vdwg.mxu0
        %390 = vmax.xlane.f32.xlu0 %v387
        %v391 = vpop.xlane.xlu0 %390
        %v392 = vsub.f32 %v387, %v391
        %v393 = vmul.f32 %v392, 1.442695
        %v394 = vpow.pop %v393
        %395 = vadd.xlane.f32.xlu0 %v394
        %v396 = vpop.xlane.xlu0 %395
        %v397 = vrcp.pop %v396
        %v398 = vmul.f32 %v394, %v397
        %v399 = vsub.f32 %v398, 0.0025
        %vm400 = vcmp.gt.f32.partialorder %v398, 0.0025
        %v401 = vsel %vm400, %v399, 1.0
        %v402 = vadd.f32 %v401, 1e-12
        %v403 = vmul.f32 %v398, %v399
        %v404 = vrcp.pop %v402
        %v405 = vmul.f32 %v403, %v404
        %v406 = vsel %vm400, %v405, 0.0
        %407 = vadd.xlane.f32.xlu0 %v406
        %v408 = vpop.xlane.xlu0 %407
        %v409 = vmax.f32 %v408, 1e-12
        %v410 = vrcp.pop %v409
        %v411 = vmul.f32 %v406, %v410
        %412 = vmatprep.subr.mxu0 0.0
        %413 = vmatpush1.msra.mxu0 %v297
        %414 = vmatprep.subr.mxu0 0.0
        %415 = vmatpush1.msra.mxu0 %v298
        %416 = vmatprep.subr.mxu0 0.0
        %417 = vmatpush1.msra.mxu0 %v299
        %418 = vmatprep.subr.mxu0 0.0
        %419 = vmatpush1.msra.mxu0 %v300
        %420 = vmatprep.subr.mxu0 0.0
        %421 = vmatpush1.msra.mxu0 %v301
        %422 = vmatprep.subr.mxu0 0.0
        %423 = vmatpush1.msra.mxu0 %v302
        %424 = vmatprep.subr.mxu0 0.0
        %425 = vmatpush1.msra.mxu0 %v303
        %426 = vmatprep.subr.mxu0 0.0
        %427 = vmatpush1.msra.mxu0 %v304
        %428 = vmatprep.subr.mxu0 0.0
        %429 = vmatpush1.msra.mxu0 %v305
        %430 = vmatprep.subr.mxu0 0.0
        %431 = vmatpush1.msra.mxu0 %v306
        %432 = vmatprep.subr.mxu0 0.0
        %433 = vmatpush1.msra.mxu0 %v307
        %434 = vmatprep.subr.mxu0 0.0
        %435 = vmatpush1.msra.mxu0 %v308
        %436 = vmatprep.subr.mxu0 0.0
        %437 = vmatpush1.msra.mxu0 %v309
        %438 = vmatprep.subr.mxu0 0.0
        %439 = vmatpush1.msra.mxu0 %v310
        %440 = vmatprep.subr.mxu0 0.0
        %441 = vmatpush1.msra.mxu0 %v311
        %442 = vmatprep.subr.mxu0 0.0
        %443 = vmatpush1.msra.mxu0 %v312
        %444 = vmatprep.subr.mxu0 0.0
        %445 = vmatpush1.msra.mxu0 0.0
        %446 = vmatprep.subr.mxu0 0.0
        %447 = vmatpush1.msra.mxu0 0.0
        %448 = vmatprep.subr.mxu0 0.0
        %449 = vmatpush1.msra.mxu0 0.0
        %450 = vmatprep.subr.mxu0 0.0
        %451 = vmatpush1.msra.mxu0 0.0
        %452 = vmatprep.subr.mxu0 0.0
        %453 = vmatpush1.msra.mxu0 0.0
        %454 = vmatprep.subr.mxu0 0.0
        %455 = vmatpush1.msra.mxu0 0.0
        %456 = vmatprep.subr.mxu0 0.0
        %457 = vmatpush1.msra.mxu0 0.0
        %458 = vmatprep.subr.mxu0 0.0
        %459 = vmatpush1.msra.mxu0 0.0
        %460 = vmatprep.subr.mxu0 0.0
        %461 = vmatpush1.msra.mxu0 0.0
        %462 = vmatprep.subr.mxu0 0.0
        %463 = vmatpush1.msra.mxu0 0.0
        %464 = vmatprep.subr.mxu0 0.0
        %465 = vmatpush1.msra.mxu0 0.0
        %466 = vmatprep.subr.mxu0 0.0
        %467 = vmatpush1.msra.mxu0 0.0
        %468 = vmatprep.subr.mxu0 0.0
        %469 = vmatpush1.msra.mxu0 0.0
        %470 = vmatprep.subr.mxu0 0.0
        %471 = vmatpush1.msra.mxu0 0.0
        %472 = vmatprep.subr.mxu0 0.0
        %473 = vmatpush1.msra.mxu0 0.0
        %474 = vmatprep.subr.mxu0 0.0
        %475 = vmatpush1.msra.mxu0 0.0
        %476 = vmatprep.mubr.f32.mxu0 0.0
        %477 = vmatmul.mubr.f32.gmra.mrb[0].mxu0 %v411
        %v478 = vpop.f32.mrb[0].mxu0
        %v479 = vadd.f32 0.0, %v478
        %v480 = vpop.f32.mrb[0].mxu0
        %481 = vdwg.mxu0
        %482 = vst [vmem:[%s272] sm:$0xff] %v479
        %483 = vst [vmem:[%s279] sm:$0xff] %v411
        %s484 = sand.u32 %s124, 1
        %s485 = scalar_lea.sflag [#allocation4], %s484
        %s486 = sand.u32 %s124, 1
        %s487 = smul.addr %s486, 8
        %s488 = scalar_lea.vmem [#allocation8], %s487
        %s489 = sand.u32 %s150, 1
        %s490 = scalar_lea.sflag [#allocation10], %s489
        %s491 = sand.u32 %s150, 1
        %s492 = smul.addr %s491, 8
        %s493 = scalar_lea.vmem [#allocation9], %s492
        // Predicated region
        $region49: #{tpu_custom_call.1} parent=35 // pred_check
          %p494 = pneg %p134
        $region50: #{tpu_custom_call.1} parent=35 // pred_check_branch
          %496 = sbr.rel (%p494) target = $region52
        $region51: #{tpu_custom_call.1} parent=35 // pred_region
          %s498 = ssub.s32 128, 128
          %499 = vsyncadd %s485, %s498
          %s500 = smul.addr %s27, 128
          %s501 = scalar_lea.hbm %s4, %s500
          %s503 = sshll.u32 %s488, 4
          %s504 = int_to_ptr.vmem [resolvable:$true] %s503
          %506 = dma.vmem_to_hbm [thread:$0]  %s504, 128, %s501, %s485
        $region52: #{tpu_custom_call.1} parent=35 // pred_fallthru
          _
        // Predicated region
        $region53: #{tpu_custom_call.1} parent=35 // pred_check
          %p507 = pneg %p160
        $region54: #{tpu_custom_call.1} parent=35 // pred_check_branch
          %509 = sbr.rel (%p507) target = $region56
        $region55: #{tpu_custom_call.1} parent=35 // pred_region
          %s511 = ssub.s32 128, 128
          %512 = vsyncadd %s490, %s511
          %s513 = smul.addr %s27, 128
          %s514 = scalar_lea.hbm %s5, %s513
          %s516 = sshll.u32 %s493, 4
          %s517 = int_to_ptr.vmem [resolvable:$true] %s516
          %519 = dma.vmem_to_hbm [thread:$0]  %s517, 128, %s514, %s490
        $region56: #{tpu_custom_call.1} parent=35 // pred_fallthru
          _
      $region36: #{tpu_custom_call.1} parent=5 // pred_fallthru
        _
      %p520 = scmp.le.s32.totalorder 2, %s22
      // Predicated region
      $region57: #{tpu_custom_call.1} parent=5 // pred_check
        %p521 = pneg %p520
      $region58: #{tpu_custom_call.1} parent=5 // pred_check_branch
        %523 = sbr.rel (%p521) target = $region60
      $region59: #{tpu_custom_call.1} parent=5 // pred_region
        %s524 = ssub.s32 %s22, 2
        // Predicated region
        $region61: #{tpu_custom_call.1} parent=59 // pred_check
          %p525 = pneg %p140
        $region62: #{tpu_custom_call.1} parent=59 // pred_check_branch
          %527 = sbr.rel (%p525) target = $region64
        $region63: #{tpu_custom_call.1} parent=59 // pred_region
          %s528 = sand.u32 %s125, 1
          %s529 = scalar_lea.sflag [#allocation4], %s528
          %s530 = sand.u32 %s125, 1
          %s531 = smul.addr %s530, 8
          %s532 = scalar_lea.vmem [#allocation8], %s531
          %533 = dma.done %s529, 128
        $region64: #{tpu_custom_call.1} parent=59 // pred_fallthru
          _
        // Predicated region
        $region65: #{tpu_custom_call.1} parent=59 // pred_check
          %p534 = pneg %p166
        $region66: #{tpu_custom_call.1} parent=59 // pred_check_branch
          %536 = sbr.rel (%p534) target = $region68
        $region67: #{tpu_custom_call.1} parent=59 // pred_region
          %s537 = sand.u32 %s151, 1
          %s538 = scalar_lea.sflag [#allocation10], %s537
          %s539 = sand.u32 %s151, 1
          %s540 = smul.addr %s539, 8
          %s541 = scalar_lea.vmem [#allocation9], %s540
          %542 = dma.done %s538, 128
        $region68: #{tpu_custom_call.1} parent=59 // pred_fallthru
          _
      $region60: #{tpu_custom_call.1} parent=5 // pred_fallthru
        _
    $region6: #{tpu_custom_call.1} parent=1 // loop_footer
      %s26 = sadd.s32 1, %s22
    $region7: #{tpu_custom_call.1} parent=1 // loop_footer_branch
      %21 = sbr.rel target = $region3
    $region8: #{tpu_custom_call.1} parent=1 // loop_exit
      _
    %543 = vsyncpa [#allocation3], 1
    %s544 = scalar_lea.sflag [#allocation3], 1
    %545 = vsyncpa %s544, 1
    %546 = vsyncpa [#allocation6], 1
    %547 = vsyncpa [#allocation4], 1
    %s548 = scalar_lea.sflag [#allocation4], 1
    %549 = vsyncpa %s548, 1
    %550 = vsyncpa [#allocation10], 1
    %s551 = scalar_lea.sflag [#allocation10], 1
    %552 = vsyncpa %s551, 1

</llo_original>
